<compile_context>
chip_gen: v7x
topology: tpu7x:2x2x1
jax: 0.10.0
libtpu: 0.0.40
codegen_flags: <defaults>
</compile_context>

<pallas_src>
import functools

import jax
import jax.numpy as jnp
from jax.experimental import pallas as pl
from jax.experimental.pallas import tpu as pltpu

LANE_WIDTH = 1024            # lane-dense last dim (multiple of 128)
MAX_BLOCK_ROWS = 1024        # 1024 x 1024 x 4B = 4 MiB f32 per output block
MIN_PALLAS_ELEMENTS = 65536  # below this, plain jnp beats a kernel launch


def _number_preprocess_kernel(params_ref, x_ref, o_ref, *, mode):
    """Elementwise numeric-transform hot path.

    `mode` is Python-static (fixes the structure of the transform); the
    transform parameters live in SMEM (`params_ref`) so different
    mean/std/min/max values reuse the same compiled kernel.
    """
    x = x_ref[...].astype(jnp.float32)  # matches v.to(dtype=torch.float32)
    if mode == "log1p":
        o_ref[...] = jnp.log1p(x)
    else:  # 'zscore' / 'minmax': (x - p0) * (1/p1), 1/p1 precomputed on host
        p0 = params_ref[0]
        inv_p1 = params_ref[1]
        o_ref[...] = (x - p0) * inv_p1


def _round_up(n, m):
    return ((n + m - 1) // m) * m


def _apply_jnp(xf, mode, p0, inv_p1):
    """Plain-XLA elementwise transform (small-column fallback + ragged tail)."""
    if mode == "log1p":
        return jnp.log1p(xf)
    return (xf - p0) * inv_p1


def number_preprocessing(x, *, normalization=None, metadata=None):
    """JAX/Pallas equivalent of _NumberPreprocessing.forward.

    x: array of any shape / dtype (the numeric column).
    normalization: one of None, 'zscore', 'minmax', 'log1p'.
    metadata: dict with transformer parameters ('mean'/'std' or 'min'/'max').
    Returns a float32 array with the same shape as x.
    """
    metadata = metadata or {}

    # Identity transformer: forward is just the float32 cast.
    if normalization is None:
        return x.astype(jnp.float32)

    if normalization == "zscore":
        p0, p1 = float(metadata["mean"]), float(metadata["std"])
    elif normalization == "minmax":
        mn, mx = float(metadata["min"]), float(metadata["max"])
        p0, p1 = mn, mx - mn
    elif normalization == "log1p":
        p0, p1 = 0.0, 1.0
    else:
        raise ValueError(f"Unsupported normalization: {normalization}")
    # Matches the reference's division semantics for degenerate std/range.
    inv_p1 = (1.0 / p1) if p1 != 0.0 else float("inf")

    orig_shape = x.shape
    n = int(x.size)

    # Tiny columns: launch + plumbing overhead dominates — do it in plain XLA.
    if n < MIN_PALLAS_ELEMENTS:
        return _apply_jnp(x.astype(jnp.float32), normalization, p0, inv_p1)

    flat = x.reshape(-1)                      # native dtype; cast in-kernel
    n_main = (n // LANE_WIDTH) * LANE_WIDTH   # lane-aligned prefix for kernel
    rows = n_main // LANE_WIDTH

    itemsize = jnp.dtype(x.dtype).itemsize
    sublane_pack = max(8, 32 // max(itemsize, 1))  # 8 f32 / 16 bf16 / 32 int8
    if rows >= 2 * MAX_BLOCK_ROWS:
        block_rows = MAX_BLOCK_ROWS
    else:
        # Force >= 2 grid blocks so both v7x TensorCores get work on medium
        # columns; v5e/v6e (single TC) are unaffected.
        block_rows = _round_up(pl.cdiv(rows, 2), max(16, sublane_pack))
        block_rows = max(sublane_pack, min(block_rows, MAX_BLOCK_ROWS))
    grid = (pl.cdiv(rows, block_rows),)       # last block may be partial

    main = flat if n_main == n else flat[:n_main]
    main2d = main.reshape(rows, LANE_WIDTH)
    params = jnp.array([p0, inv_p1], dtype=jnp.float32)

    kernel = functools.partial(_number_preprocess_kernel, mode=normalization)
    out2d = pl.pallas_call(
        kernel,
        out_shape=jax.ShapeDtypeStruct((rows, LANE_WIDTH), jnp.float32),
        grid_spec=pl.GridSpec(
            grid=grid,
            in_specs=[
                pl.BlockSpec(memory_space=pltpu.MemorySpace.SMEM),
                pl.BlockSpec((block_rows, LANE_WIDTH), lambda i: (i, 0)),
            ],
            out_specs=pl.BlockSpec((block_rows, LANE_WIDTH), lambda i: (i, 0)),
        ),
        compiler_params=pltpu.CompilerParams(
            dimension_semantics=("parallel",),
            vmem_limit_bytes=32 << 20,
        ),
        cost_estimate=pl.CostEstimate(
            flops=2 * n_main,
            transcendentals=n_main if normalization == "log1p" else 0,
            bytes_accessed=n_main * itemsize + n_main * 4,
        ),
    )(params, main2d)

    out_main = out2d.reshape(n_main)
    if n_main == n:
        return out_main.reshape(orig_shape)
    # Ragged tail (< LANE_WIDTH elements): cheaper in plain jnp than padding
    # the whole column through HBM just to slice it back out.
    tail = _apply_jnp(flat[n_main:].astype(jnp.float32), normalization, p0, inv_p1)
    return jnp.concatenate([out_main, tail]).reshape(orig_shape)


def _reference(x, normalization, metadata):
    xf = x.astype(jnp.float32)
    if normalization == "zscore":
        return (xf - metadata["mean"]) / metadata["std"]
    if normalization == "minmax":
        return (xf - metadata["min"]) / (metadata["max"] - metadata["min"])
    if normalization == "log1p":
        return jnp.log1p(xf)
    return xf


if __name__ == "__main__":
    key = jax.random.PRNGKey(0)
    k1, k2, k3, k4 = jax.random.split(key, 4)

    # Numeric columns (strictly positive so log1p is well-defined).
    cases = {
        # Exact multiple of LANE_WIDTH -> fast path, 2-block grid, no tail.
        "f32_aligned": jax.random.uniform(
            k1, (128, 1024), jnp.float32, minval=0.5, maxval=10.0),
        # Ragged flat column -> kernel on aligned prefix + jnp tail.
        "f32_ragged": jax.random.uniform(
            k2, (200_000,), jnp.float32, minval=0.5, maxval=10.0),
        # bf16 2-D column batch -> native-dtype HBM read + in-kernel f32 cast.
        "bf16_2d": jax.random.uniform(
            k3, (256, 513), jnp.float32, minval=0.5, maxval=10.0
        ).astype(jnp.bfloat16),
        # Tiny column -> plain-jnp fallback path (no kernel launch).
        "f32_small": jax.random.uniform(
            k4, (2000,), jnp.float32, minval=0.5, maxval=10.0),
    }

    ok = True
    for name, x in cases.items():
        xf = x.astype(jnp.float32)
        metadata = {
            "mean": float(jnp.mean(xf)),
            "std": float(jnp.std(xf)),
            "min": float(jnp.min(xf)),
            "max": float(jnp.max(xf)),
        }
        for norm in (None, "zscore", "minmax", "log1p"):
            out = number_preprocessing(x, normalization=norm, metadata=metadata)
            out = jax.block_until_ready(out)
            ref = _reference(x, norm, metadata)
            if out.shape != x.shape or out.dtype != jnp.float32:
                ok = False
                print(f"BAD SHAPE/DTYPE for {name}, normalization={norm}")
            elif not jnp.allclose(out, ref, atol=1e-5, rtol=1e-5):
                ok = False
                print(f"MISMATCH for {name}, normalization={norm}")

    if ok:
        print("KERNEL_OK")
</pallas_src>

<mosaic_0001>
module attributes {stable_mosaic.version = 11 : i64} {
  func.func @_number_preprocess_kernel(%arg0: i32, %arg1: memref<2xf32, #tpu.memory_space<smem>>, %arg2: memref<64x1024xf32, #tpu.memory_space<vmem>>, %arg3: memref<64x1024xf32, #tpu.memory_space<vmem>>) attributes {dimension_semantics = [#tpu.dimension_semantics<parallel>], iteration_bounds = array<i64: 2>, scalar_prefetch = 0 : i64, scratch_operands = 0 : i64, tpu.core_type = #tpu.core_type<tc>, window_params = [{transform_indices = @transform_0, window_bounds = array<i64: 2>}, {transform_indices = @transform_1, window_bounds = array<i64: 64, 1024>}, {transform_indices = @transform_2, window_bounds = array<i64: 64, 1024>}]} {
    %c0 = arith.constant 0 : index
    %c0_0 = arith.constant 0 : index
    %0 = vector.load %arg2[%c0, %c0_0] : memref<64x1024xf32, #tpu.memory_space<vmem>>, vector<64x1024xf32>
    %c0_1 = arith.constant 0 : index
    %1 = memref.load %arg1[%c0_1] : memref<2xf32, #tpu.memory_space<smem>>
    %c1 = arith.constant 1 : index
    %2 = memref.load %arg1[%c1] : memref<2xf32, #tpu.memory_space<smem>>
    %3 = vector.broadcast %1 : f32 to vector<64x1024xf32>
    %4 = arith.subf %0, %3 : vector<64x1024xf32>
    %5 = vector.broadcast %2 : f32 to vector<64x1024xf32>
    %6 = arith.mulf %4, %5 : vector<64x1024xf32>
    %c0_2 = arith.constant 0 : index
    %c0_3 = arith.constant 0 : index
    %7 = vector.load %arg3[%c0_2, %c0_3] : memref<64x1024xf32, #tpu.memory_space<vmem>>, vector<64x1024xf32>
    tpu.vector_store %arg3[%c0_2, %c0_3], %6 {strides = array<i32>} : memref<64x1024xf32, #tpu.memory_space<vmem>>, vector<64x1024xf32>,
    return
  }
  func.func @transform_0(%arg0: i32) -> i32 {
    %c0_i32 = arith.constant 0 : i32
    %c0_i32_0 = arith.constant 0 : i32
    return %c0_i32 : i32
  }
  func.func @transform_1(%arg0: i32) -> (i32, i32) {
    %c0_i32 = arith.constant 0 : i32
    %c0_i32_0 = arith.constant 0 : i32
    return %arg0, %c0_i32 : i32, i32
  }
  func.func @transform_2(%arg0: i32) -> (i32, i32) {
    %c0_i32 = arith.constant 0 : i32
    %c0_i32_0 = arith.constant 0 : i32
    return %arg0, %c0_i32 : i32, i32
  }
}

</mosaic_0001>

<llo_original>
// kernel: tpu_custom_call.1
$region0: #{tpu_custom_call.1}
  #allocation0 [shape = 'u32[]', space=smem, size = 0x4, offset = 0x4, fixed_abs, tag = 'smem constant byte address 0x4 - core index']
  #allocation1 [shape = 'u32[144,128]{1,0:T(1,128)}', space=vmem, size = 0x12000, scoped, tag = 'internal scratch']
  %s0 = inlined_call_operand.hbm [shape: f32[2], index: 0, kind: input, shape index: {}]
  %s1 = inlined_call_operand.hbm [shape: f32[128,1024], index: 1, kind: input, shape index: {}]
  %s2 = inlined_call_operand.hbm [shape: f32[128,1024], index: 2, kind: output, shape index: {}]
  %s3 = sld [smem:[#allocation0]]
  $region49: #{tpu_custom_call.1} parent=0
    _
  %s5 = ssub.s32 1, %s3
  %s6 = scalar_select 0, %s5, %s3
  $region1: #{tpu_custom_call.1} parent=0
    #allocation2 [shape = 'u8[512]{0}', space=smem, size = 0x200, scoped, tag = 'input window, operand 0, single buffered']
    #allocation3 [shape = 's32[2]{0}', space=sflag, size = 0x8, scoped, tag = 'scoped memory for tpu_custom_call.1']
    #allocation4 [shape = 's32[2]{0}', space=sflag, size = 0x8, scoped, tag = 'scoped memory for tpu_custom_call.1']
    #allocation5 [shape = 's32[2]{0}', space=sflag, size = 0x8, scoped, tag = 'scoped memory for tpu_custom_call.1']
    #allocation6 [shape = 'u8[524288]{0}', space=vmem, size = 0x80000, scoped, tag = 'input window, operand 1']
    #allocation7 [shape = 'u8[524288]{0}', space=vmem, size = 0x80000, scoped, tag = 'output window, operand 0']
    %7 = vsyncpa [#allocation5], 0
    %8 = vsyncpa [#allocation3], 0
    %s9 = scalar_lea.sflag [#allocation3], 1
    %10 = vsyncpa %s9, 0
    %11 = vsyncpa [#allocation4], 0
    %s12 = scalar_lea.sflag [#allocation4], 1
    %13 = vsyncpa %s12, 0
    loop: start=0, step=1, limit=4
    $region2: #{tpu_custom_call.1} parent=1 // loop_pre_header
      _
    $region3: #{tpu_custom_call.1} parent=1 // loop_header
      %s15 = sphi 0, %s19
      %p16 = scmp.ge.s32.totalorder %s15, 4
      %s23 = sphi 0, %s23
      %s25 = sphi 0, %s23
      %s26 = sphi 0, %s25
      %s40 = sphi 0, %s26
      %s46 = sphi 0, %s48
      %s49 = sphi 0, %s46
      %s50 = sphi 0, %s49
      %s66 = sphi 0, %s50
      %s72 = sphi 0, %s74
      %s75 = sphi 0, %s72
      %s76 = sphi 0, %s75
      %s92 = sphi 0, %s76
    $region4: #{tpu_custom_call.1} parent=1 // loop_header_branch
      %18 = sbr.rel (%p16) target = $region8
    $region5: #{tpu_custom_call.1} parent=1 // loop_body
      %s20 = ssub.s32 %s15, 1
      %s21 = ssub.s32 %s15, 2
      %s22 = sadd.s32 %s15, 1
      %s24 = sadd.s32 %s23, 1
      %p27 = scmp.eq.s32.totalorder %s15, 1
      %p28 = scmp.ne.s32.totalorder %s23, %s25
      %p29 = scmp.eq.s32.totalorder %s15, 0
      %p30 = por %p28, %p29
      %p31 = scmp.ne.s32.totalorder %s23, %s25
      %p32 = scmp.eq.s32.totalorder %s20, 1
      %p33 = por %p31, %p32
      %p34 = scmp.ne.s32.totalorder %s25, %s26
      %p35 = scmp.eq.s32.totalorder %s20, 0
      %p36 = por %p34, %p35
      %p37 = scmp.ne.s32.totalorder %s25, %s26
      %p38 = scmp.eq.s32.totalorder %s21, 1
      %p39 = por %p37, %p38
      %p41 = scmp.ne.s32.totalorder %s26, %s40
      %p42 = scmp.eq.s32.totalorder %s21, 0
      %p43 = por %p41, %p42
      %s44 = ssub.s32 %s15, %s22
      %p45 = scmp.eq.s32.totalorder %s44, 0
      %s47 = sadd.s32 %s46, 1
      %s48 = scalar_select %p45, %s46, %s47
      %p51 = pneg %p45
      %p52 = scmp.eq.s32.totalorder %s15, 1
      %p53 = por %p51, %p52
      %p54 = scmp.ne.s32.totalorder %s46, %s49
      %p55 = scmp.eq.s32.totalorder %s15, 0
      %p56 = por %p54, %p55
      %p57 = scmp.ne.s32.totalorder %s46, %s49
      %p58 = scmp.eq.s32.totalorder %s20, 1
      %p59 = por %p57, %p58
      %p60 = scmp.ne.s32.totalorder %s49, %s50
      %p61 = scmp.eq.s32.totalorder %s20, 0
      %p62 = por %p60, %p61
      %p63 = scmp.ne.s32.totalorder %s49, %s50
      %p64 = scmp.eq.s32.totalorder %s21, 1
      %p65 = por %p63, %p64
      %p67 = scmp.ne.s32.totalorder %s50, %s66
      %p68 = scmp.eq.s32.totalorder %s21, 0
      %p69 = por %p67, %p68
      %s70 = ssub.s32 %s15, %s22
      %p71 = scmp.eq.s32.totalorder %s70, 0
      %s73 = sadd.s32 %s72, 1
      %s74 = scalar_select %p71, %s72, %s73
      %p77 = pneg %p71
      %p78 = scmp.eq.s32.totalorder %s15, 1
      %p79 = por %p77, %p78
      %p80 = scmp.ne.s32.totalorder %s72, %s75
      %p81 = scmp.eq.s32.totalorder %s15, 0
      %p82 = por %p80, %p81
      %p83 = scmp.ne.s32.totalorder %s72, %s75
      %p84 = scmp.eq.s32.totalorder %s20, 1
      %p85 = por %p83, %p84
      %p86 = scmp.ne.s32.totalorder %s75, %s76
      %p87 = scmp.eq.s32.totalorder %s20, 0
      %p88 = por %p86, %p87
      %p89 = scmp.ne.s32.totalorder %s75, %s76
      %p90 = scmp.eq.s32.totalorder %s21, 1
      %p91 = por %p89, %p90
      %p93 = scmp.ne.s32.totalorder %s76, %s92
      %p94 = scmp.eq.s32.totalorder %s21, 0
      %p95 = por %p93, %p94
      %p96 = scmp.le.s32.totalorder 1, %s15
      %p97 = scmp.lt.s32.totalorder %s15, 3
      %p98 = pnand %p96, %p97
      %p99 = pneg %p98
      // Predicated region
      $region9: #{tpu_custom_call.1} parent=5 // pred_check
        _
      $region10: #{tpu_custom_call.1} parent=5 // pred_check_branch
        %101 = sbr.rel (%p98) target = $region12
      $region11: #{tpu_custom_call.1} parent=5 // pred_region
        %s102 = ssub.s32 %s15, 1
        // Predicated region
        $region13: #{tpu_custom_call.1} parent=11 // pred_check
          %p103 = pneg %p36
        $region14: #{tpu_custom_call.1} parent=11 // pred_check_branch
          %105 = sbr.rel (%p103) target = $region16
        $region15: #{tpu_custom_call.1} parent=11 // pred_region
          %s107 = ssub.s32 16, 16
          %108 = vsyncadd [#allocation5], %s107
          %111 = dma.hbm_to_smem %s0, 16, [#allocation2], [#allocation5]
        $region16: #{tpu_custom_call.1} parent=11 // pred_fallthru
          _
      $region12: #{tpu_custom_call.1} parent=5 // pred_fallthru
        _
      %p112 = scmp.lt.s32.totalorder %s15, 2
      // Predicated region
      $region17: #{tpu_custom_call.1} parent=5 // pred_check
        %p113 = pneg %p112
      $region18: #{tpu_custom_call.1} parent=5 // pred_check_branch
        %115 = sbr.rel (%p113) target = $region20
      $region19: #{tpu_custom_call.1} parent=5 // pred_region
        // Predicated region
        $region21: #{tpu_custom_call.1} parent=19 // pred_check
          %p116 = pneg %p56
        $region22: #{tpu_custom_call.1} parent=19 // pred_check_branch
          %118 = sbr.rel (%p116) target = $region24
        $region23: #{tpu_custom_call.1} parent=19 // pred_region
          %s119 = sand.u32 %s46, 1
          %s120 = scalar_lea.sflag [#allocation3], %s119
          %s121 = sand.u32 %s46, 1
          %s122 = smul.addr %s121, 512
          %s123 = scalar_lea.vmem [#allocation6], %s122
          %s124 = smul.u32 8, %s15
          %s126 = ssub.s32 8192, 8192
          %127 = vsyncadd %s120, %s126
          %s128 = smul.addr %s124, 8
          %s129 = smul.addr %s128, 128
          %s130 = scalar_lea.hbm %s1, %s129
          %s131 = sshll.u32 %s123, 4
          %s132 = int_to_ptr.vmem [resolvable:$true] %s131
          %137 = dma.hbm_to_vmem [thread:$0]  %s130, 8192, %s132, %s120, 1024, 1024, 64
        $region24: #{tpu_custom_call.1} parent=19 // pred_fallthru
          _
      $region20: #{tpu_custom_call.1} parent=5 // pred_fallthru
        _
      %p138 = scmp.le.s32.totalorder 1, %s15
      %p139 = scmp.lt.s32.totalorder %s15, 3
      %p140 = pnand %p138, %p139
      %p141 = pneg %p140
      // Predicated region
      $region25: #{tpu_custom_call.1} parent=5 // pred_check
        _
      $region26: #{tpu_custom_call.1} parent=5 // pred_check_branch
        %143 = sbr.rel (%p140) target = $region28
      $region27: #{tpu_custom_call.1} parent=5 // pred_region
        %s144 = ssub.s32 %s15, 1
        // Predicated region
        $region29: #{tpu_custom_call.1} parent=27 // pred_check
          %p145 = pneg %p36
        $region30: #{tpu_custom_call.1} parent=27 // pred_check_branch
          %147 = sbr.rel (%p145) target = $region32
        $region31: #{tpu_custom_call.1} parent=27 // pred_region
          %148 = dma.done [#allocation5], 16
        $region32: #{tpu_custom_call.1} parent=27 // pred_fallthru
          _
        %s149 = sand.u32 %s49, 1
        %s150 = scalar_lea.sflag [#allocation3], %s149
        %s151 = sand.u32 %s49, 1
        %s152 = smul.addr %s151, 512
        %s153 = scalar_lea.vmem [#allocation6], %s152
        // Predicated region
        $region33: #{tpu_custom_call.1} parent=27 // pred_check
          %p154 = pneg %p62
        $region34: #{tpu_custom_call.1} parent=27 // pred_check_branch
          %156 = sbr.rel (%p154) target = $region36
        $region35: #{tpu_custom_call.1} parent=27 // pred_region
          %157 = dma.done %s150, 8192
        $region36: #{tpu_custom_call.1} parent=27 // pred_fallthru
          _
        %158 = sfence
        %p159 = pneg %p36
        %p160 = pneg %p33
        %s161 = sand.u32 %s49, 1
        %s162 = scalar_lea.sflag [#allocation3], %s161
        %s163 = sand.u32 %s49, 1
        %s164 = smul.addr %s163, 512
        %s165 = scalar_lea.vmem [#allocation6], %s164
        %p166 = pneg %p62
        %p167 = pneg %p59
        %p168 = pneg %p88
        %p169 = pneg %p85
        %s170 = sand.u32 %s75, 1
        %s171 = scalar_lea.sflag [#allocation4], %s170
        %s172 = sand.u32 %s75, 1
        %s173 = smul.addr %s172, 512
        %s174 = scalar_lea.vmem [#allocation7], %s173
        %s175 = smul.u32 8, %s20
        %s176 = smul.u32 8, %s20
        %v177 = vld [vmem:[%s153] sm:$0xff]
        %v178 = vld [vmem:[%s153 + $0x8] sm:$0xff]
        %v179 = vld [vmem:[%s153 + $0x10] sm:$0xff]
        %v180 = vld [vmem:[%s153 + $0x18] sm:$0xff]
        %v181 = vld [vmem:[%s153 + $0x20] sm:$0xff]
        %v182 = vld [vmem:[%s153 + $0x28] sm:$0xff]
        %v183 = vld [vmem:[%s153 + $0x30] sm:$0xff]
        %v184 = vld [vmem:[%s153 + $0x38] sm:$0xff]
        %v185 = vld [vmem:[%s153 + $0x40] sm:$0xff]
        %v186 = vld [vmem:[%s153 + $0x48] sm:$0xff]
        %v187 = vld [vmem:[%s153 + $0x50] sm:$0xff]
        %v188 = vld [vmem:[%s153 + $0x58] sm:$0xff]
        %v189 = vld [vmem:[%s153 + $0x60] sm:$0xff]
        %v190 = vld [vmem:[%s153 + $0x68] sm:$0xff]
        %v191 = vld [vmem:[%s153 + $0x70] sm:$0xff]
        %v192 = vld [vmem:[%s153 + $0x78] sm:$0xff]
        %v193 = vld [vmem:[%s153 + $0x80] sm:$0xff]
        %v194 = vld [vmem:[%s153 + $0x88] sm:$0xff]
        %v195 = vld [vmem:[%s153 + $0x90] sm:$0xff]
        %v196 = vld [vmem:[%s153 + $0x98] sm:$0xff]
        %v197 = vld [vmem:[%s153 + $0xa0] sm:$0xff]
        %v198 = vld [vmem:[%s153 + $0xa8] sm:$0xff]
        %v199 = vld [vmem:[%s153 + $0xb0] sm:$0xff]
        %v200 = vld [vmem:[%s153 + $0xb8] sm:$0xff]
        %v201 = vld [vmem:[%s153 + $0xc0] sm:$0xff]
        %v202 = vld [vmem:[%s153 + $0xc8] sm:$0xff]
        %v203 = vld [vmem:[%s153 + $0xd0] sm:$0xff]
        %v204 = vld [vmem:[%s153 + $0xd8] sm:$0xff]
        %v205 = vld [vmem:[%s153 + $0xe0] sm:$0xff]
        %v206 = vld [vmem:[%s153 + $0xe8] sm:$0xff]
        %v207 = vld [vmem:[%s153 + $0xf0] sm:$0xff]
        %v208 = vld [vmem:[%s153 + $0xf8] sm:$0xff]
        %v209 = vld [vmem:[%s153 + $0x100] sm:$0xff]
        %v210 = vld [vmem:[%s153 + $0x108] sm:$0xff]
        %v211 = vld [vmem:[%s153 + $0x110] sm:$0xff]
        %v212 = vld [vmem:[%s153 + $0x118] sm:$0xff]
        %v213 = vld [vmem:[%s153 + $0x120] sm:$0xff]
        %v214 = vld [vmem:[%s153 + $0x128] sm:$0xff]
        %v215 = vld [vmem:[%s153 + $0x130] sm:$0xff]
        %v216 = vld [vmem:[%s153 + $0x138] sm:$0xff]
        %v217 = vld [vmem:[%s153 + $0x140] sm:$0xff]
        %v218 = vld [vmem:[%s153 + $0x148] sm:$0xff]
        %v219 = vld [vmem:[%s153 + $0x150] sm:$0xff]
        %v220 = vld [vmem:[%s153 + $0x158] sm:$0xff]
        %v221 = vld [vmem:[%s153 + $0x160] sm:$0xff]
        %v222 = vld [vmem:[%s153 + $0x168] sm:$0xff]
        %v223 = vld [vmem:[%s153 + $0x170] sm:$0xff]
        %v224 = vld [vmem:[%s153 + $0x178] sm:$0xff]
        %v225 = vld [vmem:[%s153 + $0x180] sm:$0xff]
        %v226 = vld [vmem:[%s153 + $0x188] sm:$0xff]
        %v227 = vld [vmem:[%s153 + $0x190] sm:$0xff]
        %v228 = vld [vmem:[%s153 + $0x198] sm:$0xff]
        %v229 = vld [vmem:[%s153 + $0x1a0] sm:$0xff]
        %v230 = vld [vmem:[%s153 + $0x1a8] sm:$0xff]
        %v231 = vld [vmem:[%s153 + $0x1b0] sm:$0xff]
        %v232 = vld [vmem:[%s153 + $0x1b8] sm:$0xff]
        %v233 = vld [vmem:[%s153 + $0x1c0] sm:$0xff]
        %v234 = vld [vmem:[%s153 + $0x1c8] sm:$0xff]
        %v235 = vld [vmem:[%s153 + $0x1d0] sm:$0xff]
        %v236 = vld [vmem:[%s153 + $0x1d8] sm:$0xff]
        %v237 = vld [vmem:[%s153 + $0x1e0] sm:$0xff]
        %v238 = vld [vmem:[%s153 + $0x1e8] sm:$0xff]
        %v239 = vld [vmem:[%s153 + $0x1f0] sm:$0xff]
        %v240 = vld [vmem:[%s153 + $0x1f8] sm:$0xff]
        %s241 = sld [smem:[#allocation2]]
        %s242 = sld [smem:[#allocation2 + $0x1]]
        %v243 = vstv %s241
        %v244 = vsub.f32 %v177, %v243
        %v245 = vsub.f32 %v178, %v243
        %v246 = vsub.f32 %v179, %v243
        %v247 = vsub.f32 %v180, %v243
        %v248 = vsub.f32 %v181, %v243
        %v249 = vsub.f32 %v182, %v243
        %v250 = vsub.f32 %v183, %v243
        %v251 = vsub.f32 %v184, %v243
        %v252 = vsub.f32 %v185, %v243
        %v253 = vsub.f32 %v186, %v243
        %v254 = vsub.f32 %v187, %v243
        %v255 = vsub.f32 %v188, %v243
        %v256 = vsub.f32 %v189, %v243
        %v257 = vsub.f32 %v190, %v243
        %v258 = vsub.f32 %v191, %v243
        %v259 = vsub.f32 %v192, %v243
        %v260 = vsub.f32 %v193, %v243
        %v261 = vsub.f32 %v194, %v243
        %v262 = vsub.f32 %v195, %v243
        %v263 = vsub.f32 %v196, %v243
        %v264 = vsub.f32 %v197, %v243
        %v265 = vsub.f32 %v198, %v243
        %v266 = vsub.f32 %v199, %v243
        %v267 = vsub.f32 %v200, %v243
        %v268 = vsub.f32 %v201, %v243
        %v269 = vsub.f32 %v202, %v243
        %v270 = vsub.f32 %v203, %v243
        %v271 = vsub.f32 %v204, %v243
        %v272 = vsub.f32 %v205, %v243
        %v273 = vsub.f32 %v206, %v243
        %v274 = vsub.f32 %v207, %v243
        %v275 = vsub.f32 %v208, %v243
        %v276 = vsub.f32 %v209, %v243
        %v277 = vsub.f32 %v210, %v243
        %v278 = vsub.f32 %v211, %v243
        %v279 = vsub.f32 %v212, %v243
        %v280 = vsub.f32 %v213, %v243
        %v281 = vsub.f32 %v214, %v243
        %v282 = vsub.f32 %v215, %v243
        %v283 = vsub.f32 %v216, %v243
        %v284 = vsub.f32 %v217, %v243
        %v285 = vsub.f32 %v218, %v243
        %v286 = vsub.f32 %v219, %v243
        %v287 = vsub.f32 %v220, %v243
        %v288 = vsub.f32 %v221, %v243
        %v289 = vsub.f32 %v222, %v243
        %v290 = vsub.f32 %v223, %v243
        %v291 = vsub.f32 %v224, %v243
        %v292 = vsub.f32 %v225, %v243
        %v293 = vsub.f32 %v226, %v243
        %v294 = vsub.f32 %v227, %v243
        %v295 = vsub.f32 %v228, %v243
        %v296 = vsub.f32 %v229, %v243
        %v297 = vsub.f32 %v230, %v243
        %v298 = vsub.f32 %v231, %v243
        %v299 = vsub.f32 %v232, %v243
        %v300 = vsub.f32 %v233, %v243
        %v301 = vsub.f32 %v234, %v243
        %v302 = vsub.f32 %v235, %v243
        %v303 = vsub.f32 %v236, %v243
        %v304 = vsub.f32 %v237, %v243
        %v305 = vsub.f32 %v238, %v243
        %v306 = vsub.f32 %v239, %v243
        %v307 = vsub.f32 %v240, %v243
        %v308 = vstv %s242
        %v309 = vmul.f32 %v244, %v308
        %v310 = vmul.f32 %v245, %v308
        %v311 = vmul.f32 %v246, %v308
        %v312 = vmul.f32 %v247, %v308
        %v313 = vmul.f32 %v248, %v308
        %v314 = vmul.f32 %v249, %v308
        %v315 = vmul.f32 %v250, %v308
        %v316 = vmul.f32 %v251, %v308
        %v317 = vmul.f32 %v252, %v308
        %v318 = vmul.f32 %v253, %v308
        %v319 = vmul.f32 %v254, %v308
        %v320 = vmul.f32 %v255, %v308
        %v321 = vmul.f32 %v256, %v308
        %v322 = vmul.f32 %v257, %v308
        %v323 = vmul.f32 %v258, %v308
        %v324 = vmul.f32 %v259, %v308
        %v325 = vmul.f32 %v260, %v308
        %v326 = vmul.f32 %v261, %v308
        %v327 = vmul.f32 %v262, %v308
        %v328 = vmul.f32 %v263, %v308
        %v329 = vmul.f32 %v264, %v308
        %v330 = vmul.f32 %v265, %v308
        %v331 = vmul.f32 %v266, %v308
        %v332 = vmul.f32 %v267, %v308
        %v333 = vmul.f32 %v268, %v308
        %v334 = vmul.f32 %v269, %v308
        %v335 = vmul.f32 %v270, %v308
        %v336 = vmul.f32 %v271, %v308
        %v337 = vmul.f32 %v272, %v308
        %v338 = vmul.f32 %v273, %v308
        %v339 = vmul.f32 %v274, %v308
        %v340 = vmul.f32 %v275, %v308
        %v341 = vmul.f32 %v276, %v308
        %v342 = vmul.f32 %v277, %v308
        %v343 = vmul.f32 %v278, %v308
        %v344 = vmul.f32 %v279, %v308
        %v345 = vmul.f32 %v280, %v308
        %v346 = vmul.f32 %v281, %v308
        %v347 = vmul.f32 %v282, %v308
        %v348 = vmul.f32 %v283, %v308
        %v349 = vmul.f32 %v284, %v308
        %v350 = vmul.f32 %v285, %v308
        %v351 = vmul.f32 %v286, %v308
        %v352 = vmul.f32 %v287, %v308
        %v353 = vmul.f32 %v288, %v308
        %v354 = vmul.f32 %v289, %v308
        %v355 = vmul.f32 %v290, %v308
        %v356 = vmul.f32 %v291, %v308
        %v357 = vmul.f32 %v292, %v308
        %v358 = vmul.f32 %v293, %v308
        %v359 = vmul.f32 %v294, %v308
        %v360 = vmul.f32 %v295, %v308
        %v361 = vmul.f32 %v296, %v308
        %v362 = vmul.f32 %v297, %v308
        %v363 = vmul.f32 %v298, %v308
        %v364 = vmul.f32 %v299, %v308
        %v365 = vmul.f32 %v300, %v308
        %v366 = vmul.f32 %v301, %v308
        %v367 = vmul.f32 %v302, %v308
        %v368 = vmul.f32 %v303, %v308
        %v369 = vmul.f32 %v304, %v308
        %v370 = vmul.f32 %v305, %v308
        %v371 = vmul.f32 %v306, %v308
        %v372 = vmul.f32 %v307, %v308
        %373 = vst [vmem:[%s174] sm:$0xff] %v309
        %374 = vst [vmem:[%s174 + $0x8] sm:$0xff] %v310
        %375 = vst [vmem:[%s174 + $0x10] sm:$0xff] %v311
        %376 = vst [vmem:[%s174 + $0x18] sm:$0xff] %v312
        %377 = vst [vmem:[%s174 + $0x20] sm:$0xff] %v313
        %378 = vst [vmem:[%s174 + $0x28] sm:$0xff] %v314
        %379 = vst [vmem:[%s174 + $0x30] sm:$0xff] %v315
        %380 = vst [vmem:[%s174 + $0x38] sm:$0xff] %v316
        %381 = vst [vmem:[%s174 + $0x40] sm:$0xff] %v317
        %382 = vst [vmem:[%s174 + $0x48] sm:$0xff] %v318
        %383 = vst [vmem:[%s174 + $0x50] sm:$0xff] %v319
        %384 = vst [vmem:[%s174 + $0x58] sm:$0xff] %v320
        %385 = vst [vmem:[%s174 + $0x60] sm:$0xff] %v321
        %386 = vst [vmem:[%s174 + $0x68] sm:$0xff] %v322
        %387 = vst [vmem:[%s174 + $0x70] sm:$0xff] %v323
        %388 = vst [vmem:[%s174 + $0x78] sm:$0xff] %v324
        %389 = vst [vmem:[%s174 + $0x80] sm:$0xff] %v325
        %390 = vst [vmem:[%s174 + $0x88] sm:$0xff] %v326
        %391 = vst [vmem:[%s174 + $0x90] sm:$0xff] %v327
        %392 = vst [vmem:[%s174 + $0x98] sm:$0xff] %v328
        %393 = vst [vmem:[%s174 + $0xa0] sm:$0xff] %v329
        %394 = vst [vmem:[%s174 + $0xa8] sm:$0xff] %v330
        %395 = vst [vmem:[%s174 + $0xb0] sm:$0xff] %v331
        %396 = vst [vmem:[%s174 + $0xb8] sm:$0xff] %v332
        %397 = vst [vmem:[%s174 + $0xc0] sm:$0xff] %v333
        %398 = vst [vmem:[%s174 + $0xc8] sm:$0xff] %v334
        %399 = vst [vmem:[%s174 + $0xd0] sm:$0xff] %v335
        %400 = vst [vmem:[%s174 + $0xd8] sm:$0xff] %v336
        %401 = vst [vmem:[%s174 + $0xe0] sm:$0xff] %v337
        %402 = vst [vmem:[%s174 + $0xe8] sm:$0xff] %v338
        %403 = vst [vmem:[%s174 + $0xf0] sm:$0xff] %v339
        %404 = vst [vmem:[%s174 + $0xf8] sm:$0xff] %v340
        %405 = vst [vmem:[%s174 + $0x100] sm:$0xff] %v341
        %406 = vst [vmem:[%s174 + $0x108] sm:$0xff] %v342
        %407 = vst [vmem:[%s174 + $0x110] sm:$0xff] %v343
        %408 = vst [vmem:[%s174 + $0x118] sm:$0xff] %v344
        %409 = vst [vmem:[%s174 + $0x120] sm:$0xff] %v345
        %410 = vst [vmem:[%s174 + $0x128] sm:$0xff] %v346
        %411 = vst [vmem:[%s174 + $0x130] sm:$0xff] %v347
        %412 = vst [vmem:[%s174 + $0x138] sm:$0xff] %v348
        %413 = vst [vmem:[%s174 + $0x140] sm:$0xff] %v349
        %414 = vst [vmem:[%s174 + $0x148] sm:$0xff] %v350
        %415 = vst [vmem:[%s174 + $0x150] sm:$0xff] %v351
        %416 = vst [vmem:[%s174 + $0x158] sm:$0xff] %v352
        %417 = vst [vmem:[%s174 + $0x160] sm:$0xff] %v353
        %418 = vst [vmem:[%s174 + $0x168] sm:$0xff] %v354
        %419 = vst [vmem:[%s174 + $0x170] sm:$0xff] %v355
        %420 = vst [vmem:[%s174 + $0x178] sm:$0xff] %v356
        %421 = vst [vmem:[%s174 + $0x180] sm:$0xff] %v357
        %422 = vst [vmem:[%s174 + $0x188] sm:$0xff] %v358
        %423 = vst [vmem:[%s174 + $0x190] sm:$0xff] %v359
        %424 = vst [vmem:[%s174 + $0x198] sm:$0xff] %v360
        %425 = vst [vmem:[%s174 + $0x1a0] sm:$0xff] %v361
        %426 = vst [vmem:[%s174 + $0x1a8] sm:$0xff] %v362
        %427 = vst [vmem:[%s174 + $0x1b0] sm:$0xff] %v363
        %428 = vst [vmem:[%s174 + $0x1b8] sm:$0xff] %v364
        %429 = vst [vmem:[%s174 + $0x1c0] sm:$0xff] %v365
        %430 = vst [vmem:[%s174 + $0x1c8] sm:$0xff] %v366
        %431 = vst [vmem:[%s174 + $0x1d0] sm:$0xff] %v367
        %432 = vst [vmem:[%s174 + $0x1d8] sm:$0xff] %v368
        %433 = vst [vmem:[%s174 + $0x1e0] sm:$0xff] %v369
        %434 = vst [vmem:[%s174 + $0x1e8] sm:$0xff] %v370
        %435 = vst [vmem:[%s174 + $0x1f0] sm:$0xff] %v371
        %436 = vst [vmem:[%s174 + $0x1f8] sm:$0xff] %v372
        %s437 = sand.u32 %s75, 1
        %s438 = scalar_lea.sflag [#allocation4], %s437
        %s439 = sand.u32 %s75, 1
        %s440 = smul.addr %s439, 512
        %s441 = scalar_lea.vmem [#allocation7], %s440
        // Predicated region
        $region37: #{tpu_custom_call.1} parent=27 // pred_check
          %p442 = pneg %p85
        $region38: #{tpu_custom_call.1} parent=27 // pred_check_branch
          %444 = sbr.rel (%p442) target = $region40
        $region39: #{tpu_custom_call.1} parent=27 // pred_region
          %s445 = smul.u32 8, %s20
          %s447 = ssub.s32 8192, 8192
          %448 = vsyncadd %s438, %s447
          %s449 = smul.addr %s445, 8
          %s450 = smul.addr %s449, 128
          %s451 = scalar_lea.hbm %s2, %s450
          %s452 = sshll.u32 %s441, 4
          %s453 = int_to_ptr.vmem [resolvable:$true] %s452
          %458 = dma.vmem_to_hbm [thread:$0]  %s453, 8192, %s451, %s438, 1024, 1024, 64
        $region40: #{tpu_custom_call.1} parent=27 // pred_fallthru
          _
      $region28: #{tpu_custom_call.1} parent=5 // pred_fallthru
        _
      %p459 = scmp.le.s32.totalorder 2, %s15
      // Predicated region
      $region41: #{tpu_custom_call.1} parent=5 // pred_check
        %p460 = pneg %p459
      $region42: #{tpu_custom_call.1} parent=5 // pred_check_branch
        %462 = sbr.rel (%p460) target = $region44
      $region43: #{tpu_custom_call.1} parent=5 // pred_region
        %s463 = ssub.s32 %s15, 2
        // Predicated region
        $region45: #{tpu_custom_call.1} parent=43 // pred_check
          %p464 = pneg %p91
        $region46: #{tpu_custom_call.1} parent=43 // pred_check_branch
          %466 = sbr.rel (%p464) target = $region48
        $region47: #{tpu_custom_call.1} parent=43 // pred_region
          %s467 = sand.u32 %s76, 1
          %s468 = scalar_lea.sflag [#allocation4], %s467
          %s469 = sand.u32 %s76, 1
          %s470 = smul.addr %s469, 512
          %s471 = scalar_lea.vmem [#allocation7], %s470
          %472 = dma.done %s468, 8192
        $region48: #{tpu_custom_call.1} parent=43 // pred_fallthru
          _
      $region44: #{tpu_custom_call.1} parent=5 // pred_fallthru
        _
    $region6: #{tpu_custom_call.1} parent=1 // loop_footer
      %s19 = sadd.s32 1, %s15
    $region7: #{tpu_custom_call.1} parent=1 // loop_footer_branch
      %14 = sbr.rel target = $region3
    $region8: #{tpu_custom_call.1} parent=1 // loop_exit
      _
    %473 = vsyncpa [#allocation3], 1
    %s474 = scalar_lea.sflag [#allocation3], 1
    %475 = vsyncpa %s474, 1
    %476 = vsyncpa [#allocation4], 1
    %s477 = scalar_lea.sflag [#allocation4], 1
    %478 = vsyncpa %s477, 1
    %479 = vsyncpa [#allocation5], 1
    %s480 = scalar_lea.sflag [#allocation5], 1
    %481 = vsyncpa %s480, 1

</llo_original>
